<compile_context>
chip_gen: v6e
topology: v6e:2x2x1
jax: 0.10.0
libtpu: 0.0.40
codegen_flags: <defaults>
</compile_context>

<pallas_src>
import jax
import jax.numpy as jnp
from jax import lax
from jax.experimental import pallas as pl
from jax.experimental.pallas import tpu as pltpu

_LANE = 128
_MAX_TILE_T = 512


def _round_up(a, b):
    return (a + b - 1) // b * b


def _pick_compute_dtype():
    """bf16 operands on bf16-native MXUs (v6e/v7x); f32 elsewhere (v5e etc.)."""
    try:
        kind = jax.devices()[0].device_kind.lower()
    except Exception:
        return jnp.float32
    if ("v6" in kind) or ("v7" in kind):
        return jnp.bfloat16
    return jnp.float32


def _conv_matmul_kernel(w_ref, x_ref, o_ref):
    # w_ref: (O, KFa)  x_ref: (KFa, tile_t)  o_ref: (O, tile_t)
    # Single MXU push; bias already fused via the augmented ones-row of x / bias
    # column of w.  f32 accumulation regardless of operand dtype.
    acc = jnp.dot(w_ref[...], x_ref[...], preferred_element_type=jnp.float32)
    o_ref[...] = jnp.maximum(acc, 0.0).astype(o_ref.dtype)      # ReLU


def temporal_layer_2d(x, v, g, bias, *, kernel_size, padding_size, dilation,
                      compute_dtype=None):
    """Forward pass of TemporalLayer2d.

    x:    (N, C, H, W) float32 input.
    v:    (O, C, H, K) weight_norm direction ("weight_v").
    g:    (O,)         weight_norm magnitude ("weight_g").
    bias: (O,)         conv bias.
    Returns (N, O, 1, W_out) float32.
    """
    if compute_dtype is None:
        compute_dtype = _pick_compute_dtype()

    N, C, H, W = x.shape
    O = v.shape[0]
    K = kernel_size
    F = C * H
    pad_l = padding_size // 2
    pad_r = padding_size - pad_l
    W_pad = W + pad_l + pad_r
    W_out = W_pad - dilation * (K - 1)

    # --- parameter glue: weight normalization (PyTorch weight_norm, dim=0) ------
    v32 = v.astype(jnp.float32)
    v_norm = jnp.sqrt(jnp.sum(v32 ** 2, axis=(1, 2, 3), keepdims=True))
    w_eff = g.reshape(O, 1, 1, 1).astype(jnp.float32) * v32 / v_norm        # (O, C, H, K)
    # (O, F, K) -> (O, K, F) -> (O, K*F): K*F (dense) on the lane axis, no per-tap
    # lane-strided extracts inside the kernel.
    w_mat = w_eff.reshape(O, F, K).transpose(0, 2, 1).reshape(O, K * F)
    # Fuse the bias into the matmul: extra bias column in w, ones row in x.
    w_aug = jnp.concatenate([w_mat, bias.reshape(O, 1).astype(jnp.float32)], axis=1)

    # --- layout glue: zero-pad time, im2col over the K dilated taps -------------
    x_pad = jnp.pad(x.astype(jnp.float32), ((0, 0), (0, 0), (0, 0), (pad_l, pad_r)))
    x_flat = x_pad.reshape(N, F, W_pad)                                      # (N, F, W_pad)
    taps = [x_flat[:, :, k * dilation:k * dilation + W_out] for k in range(K)]
    cols = jnp.stack(taps, axis=0)                                           # (K, N, F, W_out)
    x_col = cols.transpose(0, 2, 1, 3).reshape(K * F, N * W_out)             # row = k*F+f, col = n*W_out+t
    x_aug = jnp.concatenate([x_col, jnp.ones((1, N * W_out), jnp.float32)], axis=0)

    # Pad the contraction dim to a multiple of 16 (clean sublane layout for f32/bf16).
    KFa = _round_up(K * F + 1, 16)
    if KFa != K * F + 1:
        w_aug = jnp.pad(w_aug, ((0, 0), (0, KFa - (K * F + 1))))
        x_aug = jnp.pad(x_aug, ((0, KFa - (K * F + 1)), (0, 0)))

    # --- lane-dense output tiling over the fused (batch * time) axis ------------
    T = N * W_out
    T_pad = _round_up(T, _LANE)
    if T_pad <= _MAX_TILE_T:
        tile_t = T_pad
    else:
        tile_t = _MAX_TILE_T
        T_pad = _round_up(T, tile_t)
    if T_pad != T:
        x_aug = jnp.pad(x_aug, ((0, 0), (0, T_pad - T)))

    w_aug = w_aug.astype(compute_dtype)
    x_aug = x_aug.astype(compute_dtype)

    grid = (T_pad // tile_t,)
    itemsize = jnp.dtype(compute_dtype).itemsize
    cost = pl.CostEstimate(
        flops=2 * O * KFa * T_pad,
        transcendentals=0,
        bytes_accessed=KFa * T_pad * itemsize + O * KFa * itemsize + O * T_pad * 4,
    )

    out = pl.pallas_call(
        _conv_matmul_kernel,
        out_shape=jax.ShapeDtypeStruct((O, T_pad), jnp.float32),
        grid_spec=pltpu.PrefetchScalarGridSpec(
            num_scalar_prefetch=0,
            grid=grid,
            in_specs=[
                pl.BlockSpec((O, KFa), lambda t: (0, 0)),        # weights + fused bias
                pl.BlockSpec((KFa, tile_t), lambda t: (0, t)),   # im2col input tile
            ],
            out_specs=pl.BlockSpec((O, tile_t), lambda t: (0, t)),
        ),
        compiler_params=pltpu.CompilerParams(
            dimension_semantics=("parallel",),
            vmem_limit_bytes=32 * 1024 * 1024,
        ),
        cost_estimate=cost,
    )(w_aug, x_aug)

    # --- un-flatten: (O, N*W_out) -> (N, O, 1, W_out) ----------------------------
    out = out[:, :T].reshape(O, N, W_out).transpose(1, 0, 2)
    return out.reshape(N, O, 1, W_out)


def _reference(x, v, g, bias, *, kernel_size, padding_size, dilation):
    N, C, H, W = x.shape
    O = v.shape[0]
    pad_l = padding_size // 2
    pad_r = padding_size - pad_l
    v_norm = jnp.sqrt(jnp.sum(v ** 2, axis=(1, 2, 3), keepdims=True))
    w_eff = g.reshape(O, 1, 1, 1) * v / v_norm
    x_pad = jnp.pad(x, ((0, 0), (0, 0), (0, 0), (pad_l, pad_r)))
    y = lax.conv_general_dilated(
        x_pad, w_eff, window_strides=(1, 1), padding="VALID",
        rhs_dilation=(1, dilation),
        dimension_numbers=("NCHW", "OIHW", "NCHW"))
    y = y + bias.reshape(1, O, 1, 1)
    return jnp.maximum(y, 0.0)


if __name__ == "__main__":
    # Small shapes consistent with the module:
    #   in_shape = (C=4, H=16, W=16), out_shape = (O=8, 1, W_out)
    N, C, H, W = 2, 4, 16, 16
    O = 8
    kernel_size = 3
    dilation = 1
    padding_size = dilation * (kernel_size - 1)           # -> W_out == W

    key = jax.random.PRNGKey(0)
    kx, kv, kg, kb = jax.random.split(key, 4)

    x = jax.random.normal(kx, (N, C, H, W), dtype=jnp.float32)

    # Deterministic parameter init (xavier_uniform-like for v; g, bias small).
    fan_in = C * H * kernel_size
    fan_out = O * H * kernel_size
    limit = jnp.sqrt(6.0 / (fan_in + fan_out))
    v = jax.random.uniform(kv, (O, C, H, kernel_size), minval=-limit, maxval=limit,
                           dtype=jnp.float32)
    g = 1.0 + 0.1 * jax.random.normal(kg, (O,), dtype=jnp.float32)
    bias = 0.1 * jax.random.normal(kb, (O,), dtype=jnp.float32)

    out = temporal_layer_2d(x, v, g, bias, kernel_size=kernel_size,
                            padding_size=padding_size, dilation=dilation)
    out = jax.block_until_ready(out)

    ref = _reference(x, v, g, bias, kernel_size=kernel_size,
                     padding_size=padding_size, dilation=dilation)
    W_out = W + padding_size - dilation * (kernel_size - 1)
    assert out.shape == ref.shape == (N, O, 1, W_out)

    tol = 1e-4 if _pick_compute_dtype() == jnp.float32 else 5e-2
    err = float(jnp.max(jnp.abs(out - ref)))
    assert err < tol, f"mismatch vs lax.conv reference: max abs err {err}"

    print("KERNEL_OK")
</pallas_src>

<mosaic_0001>
module attributes {stable_mosaic.version = 11 : i64} {
  func.func @_conv_matmul_kernel(%arg0: i32, %arg1: memref<8x208xf32, #tpu.memory_space<vmem>>, %arg2: memref<208x128xf32, #tpu.memory_space<vmem>>, %arg3: memref<8x128xf32, #tpu.memory_space<vmem>>) attributes {dimension_semantics = [#tpu.dimension_semantics<parallel>], iteration_bounds = array<i64: 1>, scalar_prefetch = 0 : i64, scratch_operands = 0 : i64, tpu.core_type = #tpu.core_type<tc>, window_params = [{pipeline_mode = #tpu.pipeline_mode<synchronous>, transform_indices = @transform_0, window_bounds = array<i64: 8, 208>}, {transform_indices = @transform_1, window_bounds = array<i64: 208, 128>}, {transform_indices = @transform_2, window_bounds = array<i64: 8, 128>}]} {
    %c0 = arith.constant 0 : index
    %c0_0 = arith.constant 0 : index
    %0 = vector.load %arg1[%c0, %c0_0] : memref<8x208xf32, #tpu.memory_space<vmem>>, vector<8x208xf32>
    %c0_1 = arith.constant 0 : index
    %c0_2 = arith.constant 0 : index
    %1 = vector.load %arg2[%c0_1, %c0_2] : memref<208x128xf32, #tpu.memory_space<vmem>>, vector<208x128xf32>
    %cst = arith.constant dense<0.000000e+00> : vector<8x128xf32>
    %2 = tpu.matmul %0, %1, %cst {dimension_numbers = #tpu.dot_dimension_numbers<[1], [0], [0], [1], [0, 0, 1, 1], [], []>} : vector<8x208xf32>, vector<208x128xf32>, vector<8x128xf32> -> vector<8x128xf32>
    %cst_3 = arith.constant 0.000000e+00 : f32
    %3 = vector.broadcast %cst_3 : f32 to vector<8x128xf32>
    %4 = arith.maximumf %2, %3 : vector<8x128xf32>
    %c0_4 = arith.constant 0 : index
    %c0_5 = arith.constant 0 : index
    %5 = vector.load %arg3[%c0_4, %c0_5] : memref<8x128xf32, #tpu.memory_space<vmem>>, vector<8x128xf32>
    tpu.vector_store %arg3[%c0_4, %c0_5], %4 {strides = array<i32>} : memref<8x128xf32, #tpu.memory_space<vmem>>, vector<8x128xf32>,
    return
  }
  func.func @transform_0(%arg0: i32) -> (i32, i32) {
    %c0_i32 = arith.constant 0 : i32
    %c0_i32_0 = arith.constant 0 : i32
    %c0_i32_1 = arith.constant 0 : i32
    return %c0_i32, %c0_i32_0 : i32, i32
  }
  func.func @transform_1(%arg0: i32) -> (i32, i32) {
    %c0_i32 = arith.constant 0 : i32
    %c0_i32_0 = arith.constant 0 : i32
    return %c0_i32, %arg0 : i32, i32
  }
  func.func @transform_2(%arg0: i32) -> (i32, i32) {
    %c0_i32 = arith.constant 0 : i32
    %c0_i32_0 = arith.constant 0 : i32
    return %c0_i32, %arg0 : i32, i32
  }
}

</mosaic_0001>

<llo_original>
// kernel: tpu_custom_call.1
$region0: #{tpu_custom_call.1}
  #allocation0 [shape = 'u32[]', space=smem, size = 0x4, offset = 0x4, fixed_abs, tag = 'smem constant byte address 0x4 - core index']
  #allocation1 [shape = 'u32[144,128]{1,0:T(1,128)}', space=vmem, size = 0x12000, scoped, tag = 'internal scratch']
  %s0 = inlined_call_operand.hbm [shape: f32[8,208], index: 0, kind: input, shape index: {}]
  %s1 = inlined_call_operand.hbm [shape: f32[208,128], index: 1, kind: input, shape index: {}]
  %s2 = inlined_call_operand.hbm [shape: f32[8,128], index: 2, kind: output, shape index: {}]
  %s3 = sld [smem:[#allocation0]]
  $region26: #{tpu_custom_call.1} parent=0
    _
  %s5 = ssub.s32 1, %s3
  %s6 = scalar_select 0, %s5, %s3
  $region1: #{tpu_custom_call.1} parent=0
    #allocation2 [shape = 'u8[8192]{0}', space=vmem, size = 0x2000, scoped, tag = 'input window, operand 0, single buffered']
    #allocation3 [shape = 's32[1]{0}', space=sflag, size = 0x4, scoped, tag = 'scoped memory for tpu_custom_call.1']
    #allocation4 [shape = 's32[1]{0}', space=sflag, size = 0x4, scoped, tag = 'scoped memory for tpu_custom_call.1']
    #allocation5 [shape = 'u8[106496]{0}', space=vmem, size = 0x1a000, scoped, tag = 'input window, operand 1, single buffered']
    #allocation6 [shape = 's32[1]{0}', space=sflag, size = 0x4, scoped, tag = 'scoped memory for tpu_custom_call.1']
    #allocation7 [shape = 'u8[4096]{0}', space=vmem, size = 0x1000, scoped, tag = 'output window, operand 0, single buffered']
    %7 = vsyncpa [#allocation3], 0
    %8 = vsyncpa [#allocation6], 0
    %9 = vsyncpa [#allocation4], 0
    // Predicated region
    $region2: #{tpu_custom_call.1} parent=1 // pred_check
      _
    $region3: #{tpu_custom_call.1} parent=1 // pred_check_branch
      %11 = sbr.rel (0) target = $region5
    $region4: #{tpu_custom_call.1} parent=1 // pred_region
      %s13 = ssub.s32 256, 256
      %14 = vsyncadd [#allocation3], %s13
      %s16 = sshll.u32 [#allocation2], 4
      %s17 = int_to_ptr.vmem [resolvable:$true] %s16
      %19 = dma.hbm_to_vmem [thread:$0]  %s0, 256, %s17, [#allocation3]
    $region5: #{tpu_custom_call.1} parent=1 // pred_fallthru
      _
    // Predicated region
    $region6: #{tpu_custom_call.1} parent=1 // pred_check
      _
    $region7: #{tpu_custom_call.1} parent=1 // pred_check_branch
      %21 = sbr.rel (0) target = $region9
    $region8: #{tpu_custom_call.1} parent=1 // pred_region
      %s23 = ssub.s32 3328, 3328
      %24 = vsyncadd [#allocation6], %s23
      %s25 = sshll.u32 [#allocation5], 4
      %s26 = int_to_ptr.vmem [resolvable:$true] %s25
      %31 = dma.hbm_to_vmem [thread:$0]  %s1, 3328, %s26, [#allocation6], 128, 128, 8
    $region9: #{tpu_custom_call.1} parent=1 // pred_fallthru
      _
    // Predicated region
    $region10: #{tpu_custom_call.1} parent=1 // pred_check
      _
    $region11: #{tpu_custom_call.1} parent=1 // pred_check_branch
      %33 = sbr.rel (0) target = $region13
    $region12: #{tpu_custom_call.1} parent=1 // pred_region
      %34 = dma.done [#allocation3], 256
    $region13: #{tpu_custom_call.1} parent=1 // pred_fallthru
      _
    // Predicated region
    $region14: #{tpu_custom_call.1} parent=1 // pred_check
      _
    $region15: #{tpu_custom_call.1} parent=1 // pred_check_branch
      %36 = sbr.rel (0) target = $region17
    $region16: #{tpu_custom_call.1} parent=1 // pred_region
      %37 = dma.done [#allocation6], 3328
    $region17: #{tpu_custom_call.1} parent=1 // pred_fallthru
      _
    %v38 = vld [vmem:[#allocation2] sm:$0xff]
    %v39 = vld [vmem:[#allocation2 + $0x8] sm:$0xff]
    %v40 = vld [vmem:[#allocation5] sm:$0xff]
    %v41 = vld [vmem:[#allocation5 + $0x8] sm:$0xff]
    %v42 = vld [vmem:[#allocation5 + $0x10] sm:$0xff]
    %v43 = vld [vmem:[#allocation5 + $0x18] sm:$0xff]
    %v44 = vld [vmem:[#allocation5 + $0x20] sm:$0xff]
    %v45 = vld [vmem:[#allocation5 + $0x28] sm:$0xff]
    %v46 = vld [vmem:[#allocation5 + $0x30] sm:$0xff]
    %v47 = vld [vmem:[#allocation5 + $0x38] sm:$0xff]
    %v48 = vld [vmem:[#allocation5 + $0x40] sm:$0xff]
    %v49 = vld [vmem:[#allocation5 + $0x48] sm:$0xff]
    %v50 = vld [vmem:[#allocation5 + $0x50] sm:$0xff]
    %v51 = vld [vmem:[#allocation5 + $0x58] sm:$0xff]
    %v52 = vld [vmem:[#allocation5 + $0x60] sm:$0xff]
    %v53 = vld [vmem:[#allocation5 + $0x68] sm:$0xff]
    %v54 = vld [vmem:[#allocation5 + $0x70] sm:$0xff]
    %v55 = vld [vmem:[#allocation5 + $0x78] sm:$0xff]
    %v56 = vld [vmem:[#allocation5 + $0x80] sm:$0xff]
    %v57 = vld [vmem:[#allocation5 + $0x88] sm:$0xff]
    %v58 = vld [vmem:[#allocation5 + $0x90] sm:$0xff]
    %v59 = vld [vmem:[#allocation5 + $0x98] sm:$0xff]
    %v60 = vld [vmem:[#allocation5 + $0xa0] sm:$0xff]
    %v61 = vld [vmem:[#allocation5 + $0xa8] sm:$0xff]
    %v62 = vld [vmem:[#allocation5 + $0xb0] sm:$0xff]
    %v63 = vld [vmem:[#allocation5 + $0xb8] sm:$0xff]
    %v64 = vld [vmem:[#allocation5 + $0xc0] sm:$0xff]
    %v65 = vld [vmem:[#allocation5 + $0xc8] sm:$0xff]
    %vm66 = vcmask 654336
    %v68 = vsel %vm66, %v39, 0
    %70 = vmatprep.subr.mxu0 0.0
    %71 = vmatpush1.msra.mxu0 %v55
    %72 = vmatprep.subr.mxu0 0.0
    %73 = vmatpush1.msra.mxu0 %v54
    %74 = vmatprep.subr.mxu0 0.0
    %75 = vmatpush1.msra.mxu0 %v53
    %76 = vmatprep.subr.mxu0 0.0
    %77 = vmatpush1.msra.mxu0 %v52
    %78 = vmatprep.subr.mxu0 0.0
    %79 = vmatpush1.msra.mxu0 %v51
    %80 = vmatprep.subr.mxu0 0.0
    %81 = vmatpush1.msra.mxu0 %v50
    %82 = vmatprep.subr.mxu0 0.0
    %83 = vmatpush1.msra.mxu0 %v49
    %84 = vmatprep.subr.mxu0 0.0
    %85 = vmatpush1.msra.mxu0 %v48
    %86 = vmatprep.subr.mxu0 0.0
    %87 = vmatpush1.msra.mxu0 %v47
    %88 = vmatprep.subr.mxu0 0.0
    %89 = vmatpush1.msra.mxu0 %v46
    %90 = vmatprep.subr.mxu0 0.0
    %91 = vmatpush1.msra.mxu0 %v45
    %92 = vmatprep.subr.mxu0 0.0
    %93 = vmatpush1.msra.mxu0 %v44
    %94 = vmatprep.subr.mxu0 0.0
    %95 = vmatpush1.msra.mxu0 %v43
    %96 = vmatprep.subr.mxu0 0.0
    %97 = vmatpush1.msra.mxu0 %v42
    %98 = vmatprep.subr.mxu0 0.0
    %99 = vmatpush1.msra.mxu0 %v41
    %100 = vmatprep.subr.mxu0 0.0
    %101 = vmatpush1.msra.mxu0 %v40
    %102 = vmatprep.subr.mxu0 0.0
    %103 = vmatpush2.msra.mxu0 0.0
    %104 = vmatprep.subr.mxu0 0.0
    %105 = vmatpush2.msra.mxu0 0.0
    %106 = vmatprep.subr.mxu0 0.0
    %107 = vmatpush2.msra.mxu0 0.0
    %108 = vmatprep.subr.mxu0 0.0
    %109 = vmatpush2.msra.mxu0 0.0
    %110 = vmatprep.subr.mxu0 0.0
    %111 = vmatpush2.msra.mxu0 0.0
    %112 = vmatprep.subr.mxu0 0.0
    %113 = vmatpush2.msra.mxu0 0.0
    %114 = vmatprep.subr.mxu0 0.0
    %115 = vmatpush2.msra.mxu0 %v65
    %116 = vmatprep.subr.mxu0 0.0
    %117 = vmatpush2.msra.mxu0 %v64
    %118 = vmatprep.subr.mxu0 0.0
    %119 = vmatpush2.msra.mxu0 %v63
    %120 = vmatprep.subr.mxu0 0.0
    %121 = vmatpush2.msra.mxu0 %v62
    %122 = vmatprep.subr.mxu0 0.0
    %123 = vmatpush2.msra.mxu0 %v61
    %124 = vmatprep.subr.mxu0 0.0
    %125 = vmatpush2.msra.mxu0 %v60
    %126 = vmatprep.subr.mxu0 0.0
    %127 = vmatpush2.msra.mxu0 %v59
    %128 = vmatprep.subr.mxu0 0.0
    %129 = vmatpush2.msra.mxu0 %v58
    %130 = vmatprep.subr.mxu0 0.0
    %131 = vmatpush2.msra.mxu0 %v57
    %132 = vmatprep.subr.mxu0 0.0
    %133 = vmatpush2.msra.mxu0 %v56
    %134 = vmatprep.mubr.f32.mxu0 %v68
    %135 = vmatmul.mubr.f32.gmra.mxu0 %v38
    %v136 = vpop.f32.mrf.mxu0
    %v137 = vadd.f32 0.0, %v136
    %v138 = vpop.f32.mrf.mxu0
    %139 = vdwg.mxu0
    %v140 = vmax.f32 %v137, 0.0
    %141 = vst [vmem:[#allocation7] sm:$0xff] %v140
    // Predicated region
    $region18: #{tpu_custom_call.1} parent=1 // pred_check
      _
    $region19: #{tpu_custom_call.1} parent=1 // pred_check_branch
      %143 = sbr.rel (0) target = $region21
    $region20: #{tpu_custom_call.1} parent=1 // pred_region
      %s145 = ssub.s32 128, 128
      %146 = vsyncadd [#allocation4], %s145
      %s148 = sshll.u32 [#allocation7], 4
      %s149 = int_to_ptr.vmem [resolvable:$true] %s148
      %151 = dma.vmem_to_hbm [thread:$0]  %s149, 128, %s2, [#allocation4]
    $region21: #{tpu_custom_call.1} parent=1 // pred_fallthru
      _
    // Predicated region
    $region22: #{tpu_custom_call.1} parent=1 // pred_check
      _
    $region23: #{tpu_custom_call.1} parent=1 // pred_check_branch
      %153 = sbr.rel (0) target = $region25
    $region24: #{tpu_custom_call.1} parent=1 // pred_region
      %154 = dma.done [#allocation4], 128
    $region25: #{tpu_custom_call.1} parent=1 // pred_fallthru
      _
    %155 = vsyncpa [#allocation3], 1
    %156 = vsyncpa [#allocation6], 1
    %157 = vsyncpa [#allocation4], 1

</llo_original>
